<compile_context>
chip_gen: v7x
topology: tpu7x:2x2x1
jax: 0.10.0
libtpu: 0.0.40
codegen_flags: <defaults>
</compile_context>

<pallas_src>
import functools

import jax
import jax.numpy as jnp
from jax.experimental import pallas as pl
from jax.experimental.pallas import tpu as pltpu


# ----------------------------- kernels -------------------------------------


def _mil_h_kernel(x_ref, w0_ref, b0_ref, h_ref, *, compute_dtype):
    """h = ReLU(x @ w0 + b0). Module-faithful fast path (A is discarded anyway)."""
    x = x_ref[...].astype(compute_dtype)            # in-kernel cast; x stays f32 in HBM
    h = jnp.dot(x, w0_ref[...], preferred_element_type=jnp.float32)
    h = jnp.maximum(h + b0_ref[...], 0.0)
    h_ref[...] = h.astype(h_ref.dtype)


def _mil_full_kernel(x_ref, w0_ref, b0_ref, wab_ref, bab_ref, wc_ref, bc_ref,
                     h_ref, A_ref, *, L2, compute_dtype):
    """Full forward: h plus the gated-attention logit A."""
    # Linear(L0 -> L1) + ReLU, f32 accumulation on the MXU.
    x = x_ref[...].astype(compute_dtype)
    h = jnp.dot(x, w0_ref[...], preferred_element_type=jnp.float32)
    h = jnp.maximum(h + b0_ref[...], 0.0)
    h_ref[...] = h.astype(h_ref.dtype)

    # Fused gate projections: one (tile, 2*L2) matmul, then lane slices.
    hc = h.astype(wab_ref.dtype)
    ab = jnp.dot(hc, wab_ref[...], preferred_element_type=jnp.float32) + bab_ref[...]
    a = jnp.tanh(ab[:, :L2])
    b = jax.nn.sigmoid(ab[:, L2:])
    gated = a * b                                               # (tile, L2) f32

    # attention_c with n_classes=1: VPU multiply + lane reduce (no 1-wide matmul).
    A = jnp.sum(gated * wc_ref[...], axis=-1, keepdims=True) + bc_ref[...]
    A_ref[...] = A.astype(A_ref.dtype)


# ----------------------------- wrapper --------------------------------------


def _cdiv(a, b):
    return -(-a // b)


def _round_up(v, m):
    return ((v + m - 1) // m) * m


def _choose_tile(n, tile_n):
    """Instance-tile size.

    Whole bag in one step for small bags; once the bag is big enough, ensure an
    even number (>= 2) of grid steps so v7x's two TensorCores both get work via
    the "parallel" instance axis (cost on 1-TC chips: one extra ~0.35us step).
    """
    tile_n = max(16, _round_up(tile_n, 16))
    steps = _cdiv(n, tile_n)
    if n >= 2048:
        if steps == 1:
            steps = 2
        elif steps % 2:
            steps += 1
    tile = min(tile_n, _round_up(_cdiv(n, steps), 16))
    return max(tile, 16)


@functools.partial(
    jax.jit,
    static_argnames=("tile_n", "compute_dtype", "h_dtype", "return_attention"))
def gated_attention_mil_forward(x, params, *, tile_n=2048,
                                compute_dtype=jnp.bfloat16,
                                h_dtype=jnp.float32,
                                return_attention=False):
    """GatedAttentionMIL forward.

    x: (N, L0) or (1, N, L0) float32 bag of instance embeddings.
    Returns h.unsqueeze(0) == (1, N, L1) like the PyTorch module; with
    return_attention=True additionally returns the (discarded-by-the-module)
    attention logits A of shape (N, 1).
    """
    w0, b0, wa, ba, wb, bb, wc, bc = params
    if x.ndim == 3:                      # module squeezes a leading singleton dim
        x = x[0]
    N, L0 = x.shape
    L1 = w0.shape[1]
    L2 = wa.shape[1]
    cd = compute_dtype
    f32 = jnp.float32
    h_bytes = jnp.dtype(h_dtype).itemsize
    cd_bytes = jnp.dtype(cd).itemsize

    # --- tiling: big tiles, no padding; Pallas masks the ragged edge block.
    tile = _choose_tile(N, tile_n)
    grid = (_cdiv(N, tile),)

    # Weights/biases cast once in the wrapper (tiny); x is cast in-kernel.
    w0_c = w0.astype(cd)
    b0_c = b0.astype(f32)

    full = lambda i: (0, 0)     # whole weight/bias block every step (stays resident)
    row = lambda i: (i, 0)      # instance-tile blocks

    common_in_specs = [
        pl.BlockSpec((tile, L0), row),        # x tile, read as f32
        pl.BlockSpec(w0_c.shape, full),
        pl.BlockSpec(b0_c.shape, full),
    ]
    h_spec = pl.BlockSpec((tile, L1), row)
    cparams = pltpu.CompilerParams(
        dimension_semantics=("parallel",),
        vmem_limit_bytes=32 * 1024 * 1024,
    )

    if not return_attention:
        cost = pl.CostEstimate(
            flops=2 * N * L0 * L1,
            transcendentals=0,
            bytes_accessed=(N * L0 * 4 + N * L1 * h_bytes
                            + w0_c.size * cd_bytes + b0_c.size * 4),
        )
        h_out = pl.pallas_call(
            functools.partial(_mil_h_kernel, compute_dtype=cd),
            out_shape=jax.ShapeDtypeStruct((N, L1), h_dtype),
            grid_spec=pltpu.PrefetchScalarGridSpec(
                num_scalar_prefetch=0,
                grid=grid,
                in_specs=common_in_specs,
                out_specs=h_spec,
            ),
            compiler_params=cparams,
            cost_estimate=cost,
        )(x, w0_c, b0_c)
        return h_out[None, :, :]            # cheap reshape only, no slice copy

    # Fuse the two gate projections (tanh / sigmoid branches) into one matmul.
    wab_c = jnp.concatenate([wa, wb], axis=1).astype(cd)       # (L1, 2*L2)
    bab_c = jnp.concatenate([ba, bb], axis=1).astype(f32)      # (1, 2*L2)
    wc_row = wc.reshape(1, L2).astype(f32)                     # (1, L2)
    bc_c = bc.reshape(1, 1).astype(f32)                        # (1, 1)

    cost = pl.CostEstimate(
        flops=2 * N * L0 * L1 + 2 * N * L1 * (2 * L2) + 2 * N * L2,
        transcendentals=2 * N * L2,
        bytes_accessed=(N * L0 * 4 + N * L1 * h_bytes + N * 4
                        + (w0_c.size + wab_c.size) * cd_bytes
                        + (b0_c.size + bab_c.size + wc_row.size + bc_c.size) * 4),
    )

    h_out, a_out = pl.pallas_call(
        functools.partial(_mil_full_kernel, L2=L2, compute_dtype=cd),
        out_shape=(
            jax.ShapeDtypeStruct((N, L1), h_dtype),
            jax.ShapeDtypeStruct((N, 1), f32),
        ),
        grid_spec=pltpu.PrefetchScalarGridSpec(
            num_scalar_prefetch=0,
            grid=grid,
            in_specs=common_in_specs + [
                pl.BlockSpec(wab_c.shape, full),
                pl.BlockSpec(bab_c.shape, full),
                pl.BlockSpec(wc_row.shape, full),
                pl.BlockSpec(bc_c.shape, full),
            ],
            # NOTE: A's (tile, 1) block is a narrow (masked) store; negligible
            # bytes and the module discards A, so left lane-sparse on purpose.
            out_specs=[h_spec, pl.BlockSpec((tile, 1), row)],
        ),
        compiler_params=cparams,
        cost_estimate=cost,
    )(x, w0_c, b0_c, wab_c, bab_c, wc_row, bc_c)

    return h_out[None, :, :], a_out


# ----------------------------- test helpers ---------------------------------


def make_params(key, hidden_dims):
    """Deterministic synthetic parameters (shapes per module __init__)."""
    L0, L1, L2 = hidden_dims
    ks = jax.random.split(key, 8)
    scale = 0.05
    w0 = scale * jax.random.normal(ks[0], (L0, L1), jnp.float32)
    b0 = scale * jax.random.normal(ks[1], (1, L1), jnp.float32)
    wa = scale * jax.random.normal(ks[2], (L1, L2), jnp.float32)
    ba = scale * jax.random.normal(ks[3], (1, L2), jnp.float32)
    wb = scale * jax.random.normal(ks[4], (L1, L2), jnp.float32)
    bb = scale * jax.random.normal(ks[5], (1, L2), jnp.float32)
    wc = scale * jax.random.normal(ks[6], (L2, 1), jnp.float32)
    bc = scale * jax.random.normal(ks[7], (1, 1), jnp.float32)
    return (w0, b0, wa, ba, wb, bb, wc, bc)


def reference_forward(x, params, compute_dtype=jnp.float32):
    """Pure-JAX reference with the same casting policy as the kernel."""
    w0, b0, wa, ba, wb, bb, wc, bc = params
    cd = compute_dtype
    f32 = jnp.float32
    h = jnp.maximum(
        jnp.dot(x.astype(cd), w0.astype(cd), preferred_element_type=f32)
        + b0.astype(f32), 0.0)
    hc = h.astype(cd)
    a = jnp.tanh(
        jnp.dot(hc, wa.astype(cd), preferred_element_type=f32) + ba.astype(f32))
    b = jax.nn.sigmoid(
        jnp.dot(hc, wb.astype(cd), preferred_element_type=f32) + bb.astype(f32))
    A = jnp.dot(a * b, wc.astype(f32), preferred_element_type=f32) + bc.astype(f32)
    return h[None, :, :], A


if __name__ == "__main__":
    # Small shapes consistent with the module: hidden_dims=[256, 128, 128].
    # N=200 is deliberately NOT a multiple of the instance tile, so the
    # ragged-edge (masked) block path is exercised.
    hidden_dims = [256, 128, 128]
    N = 200

    key = jax.random.PRNGKey(0)
    k_x, k_p = jax.random.split(key)
    x = jax.random.normal(k_x, (N, hidden_dims[0]), jnp.float32)
    params = make_params(k_p, hidden_dims)

    # Full path (computes and returns A, for verification of the whole module).
    h_out, A_out = gated_attention_mil_forward(x, params, return_attention=True)
    # Module-faithful fast path (PyTorch forward returns only h.unsqueeze(0)).
    h_only = gated_attention_mil_forward(x, params, return_attention=False)
    jax.block_until_ready((h_out, A_out, h_only))

    h_ref_bf, A_ref_bf = reference_forward(x, params, compute_dtype=jnp.bfloat16)
    h_ref_f32, A_ref_f32 = reference_forward(x, params)

    assert h_out.shape == (1, N, hidden_dims[1])
    assert A_out.shape == (N, 1)
    assert h_only.shape == (1, N, hidden_dims[1])
    # Matched-precision (bf16 operands, f32 accumulation) reference.
    assert jnp.allclose(h_out, h_ref_bf, atol=1e-2, rtol=1e-2)
    assert jnp.allclose(A_out, A_ref_bf, atol=1e-2, rtol=1e-2)
    assert jnp.allclose(h_only, h_out, atol=1e-6, rtol=1e-6)
    # Loose sanity check against full-f32 math.
    assert jnp.allclose(h_out, h_ref_f32, atol=5e-2, rtol=5e-2)
    assert jnp.allclose(A_out, A_ref_f32, atol=5e-2, rtol=5e-2)
    assert jnp.all(jnp.isfinite(h_out)) and jnp.all(jnp.isfinite(A_out))

    print("KERNEL_OK")
</pallas_src>

<mosaic_0001>
module attributes {stable_mosaic.version = 11 : i64} {
  func.func @_mil_full_kernel(%arg0: i32, %arg1: memref<208x256xf32, #tpu.memory_space<vmem>>, %arg2: memref<256x128xbf16, #tpu.memory_space<vmem>>, %arg3: memref<1x128xf32, #tpu.memory_space<vmem>>, %arg4: memref<128x256xbf16, #tpu.memory_space<vmem>>, %arg5: memref<1x256xf32, #tpu.memory_space<vmem>>, %arg6: memref<1x128xf32, #tpu.memory_space<vmem>>, %arg7: memref<1x1xf32, #tpu.memory_space<vmem>>, %arg8: memref<208x128xf32, #tpu.memory_space<vmem>>, %arg9: memref<208x1xf32, #tpu.memory_space<vmem>>) attributes {dimension_semantics = [#tpu.dimension_semantics<parallel>], iteration_bounds = array<i64: 1>, scalar_prefetch = 0 : i64, scratch_operands = 0 : i64, tpu.core_type = #tpu.core_type<tc>, window_params = [{transform_indices = @transform_0, window_bounds = array<i64: 208, 256>}, {pipeline_mode = #tpu.pipeline_mode<synchronous>, transform_indices = @transform_1, window_bounds = array<i64: 256, 128>}, {pipeline_mode = #tpu.pipeline_mode<synchronous>, transform_indices = @transform_2, window_bounds = array<i64: 1, 128>}, {pipeline_mode = #tpu.pipeline_mode<synchronous>, transform_indices = @transform_3, window_bounds = array<i64: 128, 256>}, {pipeline_mode = #tpu.pipeline_mode<synchronous>, transform_indices = @transform_4, window_bounds = array<i64: 1, 256>}, {pipeline_mode = #tpu.pipeline_mode<synchronous>, transform_indices = @transform_5, window_bounds = array<i64: 1, 128>}, {pipeline_mode = #tpu.pipeline_mode<synchronous>, transform_indices = @transform_6, window_bounds = array<i64: 1, 1>}, {transform_indices = @transform_7, window_bounds = array<i64: 208, 128>}, {transform_indices = @transform_8, window_bounds = array<i64: 208, 1>}]} {
    %c0 = arith.constant 0 : index
    %c0_0 = arith.constant 0 : index
    %0 = vector.load %arg1[%c0, %c0_0] : memref<208x256xf32, #tpu.memory_space<vmem>>, vector<208x256xf32>
    %1 = arith.truncf %0 : vector<208x256xf32> to vector<208x256xbf16>
    %c0_1 = arith.constant 0 : index
    %c0_2 = arith.constant 0 : index
    %2 = vector.load %arg2[%c0_1, %c0_2] : memref<256x128xbf16, #tpu.memory_space<vmem>>, vector<256x128xbf16>
    %cst = arith.constant dense<0.000000e+00> : vector<208x128xf32>
    %3 = tpu.matmul %1, %2, %cst {dimension_numbers = #tpu.dot_dimension_numbers<[1], [0], [0], [1], [0, 0, 1, 1], [], []>} : vector<208x256xbf16>, vector<256x128xbf16>, vector<208x128xf32> -> vector<208x128xf32>
    %c0_3 = arith.constant 0 : index
    %c0_4 = arith.constant 0 : index
    %4 = vector.load %arg3[%c0_3, %c0_4] : memref<1x128xf32, #tpu.memory_space<vmem>>, vector<1x128xf32>
    %5 = vector.broadcast %4 : vector<1x128xf32> to vector<208x128xf32>
    %6 = arith.addf %3, %5 : vector<208x128xf32>
    %cst_5 = arith.constant 0.000000e+00 : f32
    %7 = vector.broadcast %cst_5 : f32 to vector<208x128xf32>
    %8 = arith.maximumf %6, %7 : vector<208x128xf32>
    %c0_6 = arith.constant 0 : index
    %c0_7 = arith.constant 0 : index
    %9 = vector.load %arg8[%c0_6, %c0_7] : memref<208x128xf32, #tpu.memory_space<vmem>>, vector<208x128xf32>
    tpu.vector_store %arg8[%c0_6, %c0_7], %8 {strides = array<i32>} : memref<208x128xf32, #tpu.memory_space<vmem>>, vector<208x128xf32>,
    %10 = arith.truncf %8 : vector<208x128xf32> to vector<208x128xbf16>
    %c0_8 = arith.constant 0 : index
    %c0_9 = arith.constant 0 : index
    %11 = vector.load %arg4[%c0_8, %c0_9] : memref<128x256xbf16, #tpu.memory_space<vmem>>, vector<128x256xbf16>
    %cst_10 = arith.constant dense<0.000000e+00> : vector<208x256xf32>
    %12 = tpu.matmul %10, %11, %cst_10 {dimension_numbers = #tpu.dot_dimension_numbers<[1], [0], [0], [1], [0, 0, 1, 1], [], []>} : vector<208x128xbf16>, vector<128x256xbf16>, vector<208x256xf32> -> vector<208x256xf32>
    %c0_11 = arith.constant 0 : index
    %c0_12 = arith.constant 0 : index
    %13 = vector.load %arg5[%c0_11, %c0_12] : memref<1x256xf32, #tpu.memory_space<vmem>>, vector<1x256xf32>
    %14 = vector.broadcast %13 : vector<1x256xf32> to vector<208x256xf32>
    %15 = arith.addf %12, %14 : vector<208x256xf32>
    %16 = vector.extract_strided_slice %15 {offsets = [0, 0], sizes = [208, 128], strides = [1, 1]} : vector<208x256xf32> to vector<208x128xf32>
    %17 = math.tanh %16 : vector<208x128xf32>
    %18 = vector.extract_strided_slice %15 {offsets = [0, 128], sizes = [208, 128], strides = [1, 1]} : vector<208x256xf32> to vector<208x128xf32>
    %19 = arith.negf %18 : vector<208x128xf32>
    %20 = math.exp %19 : vector<208x128xf32>
    %cst_13 = arith.constant 1.000000e+00 : f32
    %21 = vector.broadcast %cst_13 : f32 to vector<208x128xf32>
    %22 = arith.addf %21, %20 : vector<208x128xf32>
    %23 = arith.divf %21, %22 : vector<208x128xf32>
    %24 = arith.mulf %17, %23 : vector<208x128xf32>
    %c0_14 = arith.constant 0 : index
    %c0_15 = arith.constant 0 : index
    %25 = vector.load %arg6[%c0_14, %c0_15] : memref<1x128xf32, #tpu.memory_space<vmem>>, vector<1x128xf32>
    %26 = vector.broadcast %25 : vector<1x128xf32> to vector<208x128xf32>
    %27 = arith.mulf %24, %26 : vector<208x128xf32>
    %cst_16 = arith.constant dense<0.000000e+00> : vector<208xf32>
    %28 = vector.multi_reduction <add>, %27, %cst_16 [1] : vector<208x128xf32> to vector<208xf32>
    %29 = vector.shape_cast %28 : vector<208xf32> to vector<208x1xf32>
    %c0_17 = arith.constant 0 : index
    %c0_18 = arith.constant 0 : index
    %30 = vector.load %arg7[%c0_17, %c0_18] : memref<1x1xf32, #tpu.memory_space<vmem>>, vector<1x1xf32>
    %31 = vector.broadcast %30 : vector<1x1xf32> to vector<208x1xf32>
    %32 = arith.addf %29, %31 : vector<208x1xf32>
    %c0_19 = arith.constant 0 : index
    %c0_20 = arith.constant 0 : index
    %33 = vector.load %arg9[%c0_19, %c0_20] : memref<208x1xf32, #tpu.memory_space<vmem>>, vector<208x1xf32>
    tpu.vector_store %arg9[%c0_19, %c0_20], %32 {strides = array<i32>} : memref<208x1xf32, #tpu.memory_space<vmem>>, vector<208x1xf32>,
    return
  }
  func.func @transform_0(%arg0: i32) -> (i32, i32) {
    %c0_i32 = arith.constant 0 : i32
    %c0_i32_0 = arith.constant 0 : i32
    return %arg0, %c0_i32 : i32, i32
  }
  func.func @transform_1(%arg0: i32) -> (i32, i32) {
    %c0_i32 = arith.constant 0 : i32
    %c0_i32_0 = arith.constant 0 : i32
    %c0_i32_1 = arith.constant 0 : i32
    return %c0_i32, %c0_i32_0 : i32, i32
  }
  func.func @transform_2(%arg0: i32) -> (i32, i32) {
    %c0_i32 = arith.constant 0 : i32
    %c0_i32_0 = arith.constant 0 : i32
    %c0_i32_1 = arith.constant 0 : i32
    return %c0_i32, %c0_i32_0 : i32, i32
  }
  func.func @transform_3(%arg0: i32) -> (i32, i32) {
    %c0_i32 = arith.constant 0 : i32
    %c0_i32_0 = arith.constant 0 : i32
    %c0_i32_1 = arith.constant 0 : i32
    return %c0_i32, %c0_i32_0 : i32, i32
  }
  func.func @transform_4(%arg0: i32) -> (i32, i32) {
    %c0_i32 = arith.constant 0 : i32
    %c0_i32_0 = arith.constant 0 : i32
    %c0_i32_1 = arith.constant 0 : i32
    return %c0_i32, %c0_i32_0 : i32, i32
  }
  func.func @transform_5(%arg0: i32) -> (i32, i32) {
    %c0_i32 = arith.constant 0 : i32
    %c0_i32_0 = arith.constant 0 : i32
    %c0_i32_1 = arith.constant 0 : i32
    return %c0_i32, %c0_i32_0 : i32, i32
  }
  func.func @transform_6(%arg0: i32) -> (i32, i32) {
    %c0_i32 = arith.constant 0 : i32
    %c0_i32_0 = arith.constant 0 : i32
    %c0_i32_1 = arith.constant 0 : i32
    return %c0_i32, %c0_i32_0 : i32, i32
  }
  func.func @transform_7(%arg0: i32) -> (i32, i32) {
    %c0_i32 = arith.constant 0 : i32
    %c0_i32_0 = arith.constant 0 : i32
    return %arg0, %c0_i32 : i32, i32
  }
  func.func @transform_8(%arg0: i32) -> (i32, i32) {
    %c0_i32 = arith.constant 0 : i32
    %c0_i32_0 = arith.constant 0 : i32
    return %arg0, %c0_i32 : i32, i32
  }
}

</mosaic_0001>

<llo_original>
// kernel: gated_attention_mil_forward.1
$region0: #{gated_attention_mil_forward.1}
  #allocation0 [shape = 'u32[]', space=smem, size = 0x4, offset = 0x4, fixed_abs, tag = 'smem constant byte address 0x4 - core index']
  #allocation1 [shape = 'u32[144,128]{1,0:T(1,128)}', space=vmem, size = 0x12000, scoped, tag = 'internal scratch']
  #allocation2 [shape = 'f32[1,1]{1,0:T(1,128)S(1)}', space=vmem, size = 0x200, scoped, tag = 'scoped memory for gated_attention_mil_forward.1']
  %s0 = inlined_call_operand.vmem [shape: f32[200,256], index: 0, kind: input, shape index: {}]
  %s1 = inlined_call_operand.vmem [shape: bf16[256,128], index: 1, kind: input, shape index: {}]
  %s2 = inlined_call_operand.vmem [shape: f32[1,128], index: 2, kind: input, shape index: {}]
  %s3 = inlined_call_operand.vmem [shape: bf16[128,256], index: 3, kind: input, shape index: {}]
  %s4 = inlined_call_operand.vmem [shape: f32[1,256], index: 4, kind: input, shape index: {}]
  %s5 = inlined_call_operand.vmem [shape: f32[1,128], index: 5, kind: input, shape index: {}]
  %s6 = inlined_call_operand.<no memory space> [shape: f32[1,1], index: 6, kind: input, shape index: {}]
  %s7 = inlined_call_operand.hbm [shape: f32[200,128], index: 7, kind: output, shape index: {0}]
  %s8 = inlined_call_operand.vmem [shape: f32[200,1], index: 8, kind: output, shape index: {1}]
  %9 = xla_tuple %s7, %s8
  %s10 = sld [smem:[#allocation0]]
  $region80: #{gated_attention_mil_forward.1} parent=0
    _
  %s12 = ssub.s32 1, %s10
  %s13 = scalar_select 0, %s12, %s10
  %v14 = vstv %s6
  %15 = vst [vmem:[#allocation2] sm:$0x1] %v14
  $region1: #{gated_attention_mil_forward.1} parent=0
    #allocation3 [shape = 'u8[106496]{0}', space=vmem, size = 0x1a000, scoped, tag = 'output window, operand 0, single buffered']
    #allocation4 [shape = 's32[1]{0}', space=sflag, size = 0x4, scoped, tag = 'scoped memory for gated_attention_mil_forward.1']
    #allocation5 [shape = 'u8[106496]{0}', space=vmem, size = 0x1a000, scoped, tag = 'output window, operand 1, single buffered']
    %16 = vsyncpa [#allocation4], 0
    // Predicated region
    $region2: #{gated_attention_mil_forward.1} parent=1 // pred_check
      _
    $region3: #{gated_attention_mil_forward.1} parent=1 // pred_check_branch
      %18 = sbr.rel (0) target = $region5
    $region4: #{gated_attention_mil_forward.1} parent=1 // pred_region
      _
    $region5: #{gated_attention_mil_forward.1} parent=1 // pred_fallthru
      _
    // Predicated region
    $region6: #{gated_attention_mil_forward.1} parent=1 // pred_check
      _
    $region7: #{gated_attention_mil_forward.1} parent=1 // pred_check_branch
      %20 = sbr.rel (0) target = $region9
    $region8: #{gated_attention_mil_forward.1} parent=1 // pred_region
      _
    $region9: #{gated_attention_mil_forward.1} parent=1 // pred_fallthru
      _
    // Predicated region
    $region10: #{gated_attention_mil_forward.1} parent=1 // pred_check
      _
    $region11: #{gated_attention_mil_forward.1} parent=1 // pred_check_branch
      %22 = sbr.rel (0) target = $region13
    $region12: #{gated_attention_mil_forward.1} parent=1 // pred_region
      _
    $region13: #{gated_attention_mil_forward.1} parent=1 // pred_fallthru
      _
    // Predicated region
    $region14: #{gated_attention_mil_forward.1} parent=1 // pred_check
      _
    $region15: #{gated_attention_mil_forward.1} parent=1 // pred_check_branch
      %24 = sbr.rel (0) target = $region17
    $region16: #{gated_attention_mil_forward.1} parent=1 // pred_region
      _
    $region17: #{gated_attention_mil_forward.1} parent=1 // pred_fallthru
      _
    // Predicated region
    $region18: #{gated_attention_mil_forward.1} parent=1 // pred_check
      _
    $region19: #{gated_attention_mil_forward.1} parent=1 // pred_check_branch
      %26 = sbr.rel (0) target = $region21
    $region20: #{gated_attention_mil_forward.1} parent=1 // pred_region
      _
    $region21: #{gated_attention_mil_forward.1} parent=1 // pred_fallthru
      _
    // Predicated region
    $region22: #{gated_attention_mil_forward.1} parent=1 // pred_check
      _
    $region23: #{gated_attention_mil_forward.1} parent=1 // pred_check_branch
      %28 = sbr.rel (0) target = $region25
    $region24: #{gated_attention_mil_forward.1} parent=1 // pred_region
      _
    $region25: #{gated_attention_mil_forward.1} parent=1 // pred_fallthru
      _
    // Predicated region
    $region26: #{gated_attention_mil_forward.1} parent=1 // pred_check
      _
    $region27: #{gated_attention_mil_forward.1} parent=1 // pred_check_branch
      %30 = sbr.rel (0) target = $region29
    $region28: #{gated_attention_mil_forward.1} parent=1 // pred_region
      _
    $region29: #{gated_attention_mil_forward.1} parent=1 // pred_fallthru
      _
    %v32 = vld [vmem:[%s0] sm:$0xff]
    %v33 = vld [vmem:[%s0 + $0x8] sm:$0xff]
    %v34 = vld [vmem:[%s0 + $0x10] sm:$0xff]
    %v35 = vld [vmem:[%s0 + $0x18] sm:$0xff]
    %v36 = vld [vmem:[%s0 + $0x20] sm:$0xff]
    %v37 = vld [vmem:[%s0 + $0x28] sm:$0xff]
    %v38 = vld [vmem:[%s0 + $0x30] sm:$0xff]
    %v39 = vld [vmem:[%s0 + $0x38] sm:$0xff]
    %v40 = vld [vmem:[%s0 + $0x40] sm:$0xff]
    %v41 = vld [vmem:[%s0 + $0x48] sm:$0xff]
    %v42 = vld [vmem:[%s0 + $0x50] sm:$0xff]
    %v43 = vld [vmem:[%s0 + $0x58] sm:$0xff]
    %v44 = vld [vmem:[%s0 + $0x60] sm:$0xff]
    %v45 = vld [vmem:[%s0 + $0x68] sm:$0xff]
    %v46 = vld [vmem:[%s0 + $0x70] sm:$0xff]
    %v47 = vld [vmem:[%s0 + $0x78] sm:$0xff]
    %v48 = vld [vmem:[%s0 + $0x80] sm:$0xff]
    %v49 = vld [vmem:[%s0 + $0x88] sm:$0xff]
    %v50 = vld [vmem:[%s0 + $0x90] sm:$0xff]
    %v51 = vld [vmem:[%s0 + $0x98] sm:$0xff]
    %v52 = vld [vmem:[%s0 + $0xa0] sm:$0xff]
    %v53 = vld [vmem:[%s0 + $0xa8] sm:$0xff]
    %v54 = vld [vmem:[%s0 + $0xb0] sm:$0xff]
    %v55 = vld [vmem:[%s0 + $0xb8] sm:$0xff]
    %v56 = vld [vmem:[%s0 + $0xc0] sm:$0xff]
    %v57 = vld [vmem:[%s0 + $0xc8] sm:$0xff]
    %v58 = vld [vmem:[%s0 + $0xd0] sm:$0xff]
    %v59 = vld [vmem:[%s0 + $0xd8] sm:$0xff]
    %v60 = vld [vmem:[%s0 + $0xe0] sm:$0xff]
    %v61 = vld [vmem:[%s0 + $0xe8] sm:$0xff]
    %v62 = vld [vmem:[%s0 + $0xf0] sm:$0xff]
    %v63 = vld [vmem:[%s0 + $0xf8] sm:$0xff]
    %v64 = vld [vmem:[%s0 + $0x100] sm:$0xff]
    %v65 = vld [vmem:[%s0 + $0x108] sm:$0xff]
    %v66 = vld [vmem:[%s0 + $0x110] sm:$0xff]
    %v67 = vld [vmem:[%s0 + $0x118] sm:$0xff]
    %v68 = vld [vmem:[%s0 + $0x120] sm:$0xff]
    %v69 = vld [vmem:[%s0 + $0x128] sm:$0xff]
    %v70 = vld [vmem:[%s0 + $0x130] sm:$0xff]
    %v71 = vld [vmem:[%s0 + $0x138] sm:$0xff]
    %v72 = vld [vmem:[%s0 + $0x140] sm:$0xff]
    %v73 = vld [vmem:[%s0 + $0x148] sm:$0xff]
    %v74 = vld [vmem:[%s0 + $0x150] sm:$0xff]
    %v75 = vld [vmem:[%s0 + $0x158] sm:$0xff]
    %v76 = vld [vmem:[%s0 + $0x160] sm:$0xff]
    %v77 = vld [vmem:[%s0 + $0x168] sm:$0xff]
    %v78 = vld [vmem:[%s0 + $0x170] sm:$0xff]
    %v79 = vld [vmem:[%s0 + $0x178] sm:$0xff]
    %v80 = vld [vmem:[%s0 + $0x180] sm:$0xff]
    %v81 = vld [vmem:[%s0 + $0x188] sm:$0xff]
    %v82 = vld [vmem:[%s0 + $0x190] sm:$0xff]
    %v83 = vld [vmem:[%s0 + $0x198] sm:$0xff]
    %v84 = vpack.c.bf16 %v34, %v32
    %v85 = vpack.c.bf16 %v35, %v33
    %v86 = vpack.c.bf16 %v38, %v36
    %v87 = vpack.c.bf16 %v39, %v37
    %v88 = vpack.c.bf16 %v42, %v40
    %v89 = vpack.c.bf16 %v43, %v41
    %v90 = vpack.c.bf16 %v46, %v44
    %v91 = vpack.c.bf16 %v47, %v45
    %v92 = vpack.c.bf16 %v50, %v48
    %v93 = vpack.c.bf16 %v51, %v49
    %v94 = vpack.c.bf16 %v54, %v52
    %v95 = vpack.c.bf16 %v55, %v53
    %v96 = vpack.c.bf16 %v58, %v56
    %v97 = vpack.c.bf16 %v59, %v57
    %v98 = vpack.c.bf16 %v62, %v60
    %v99 = vpack.c.bf16 %v63, %v61
    %v100 = vpack.c.bf16 %v66, %v64
    %v101 = vpack.c.bf16 %v67, %v65
    %v102 = vpack.c.bf16 %v70, %v68
    %v103 = vpack.c.bf16 %v71, %v69
    %v104 = vpack.c.bf16 %v74, %v72
    %v105 = vpack.c.bf16 %v75, %v73
    %v106 = vpack.c.bf16 %v78, %v76
    %v107 = vpack.c.bf16 %v79, %v77
    %v108 = vpack.c.bf16 %v82, %v80
    %v109 = vpack.c.bf16 %v83, %v81
    %v110 = vld [vmem:[%s1] sm:$0xf]
    %v111 = vld [vmem:[%s1 + $0x4] sm:$0xf]
    %v112 = vld [vmem:[%s1 + $0x8] sm:$0xf]
    %v113 = vld [vmem:[%s1 + $0xc] sm:$0xf]
    %v114 = vld [vmem:[%s1 + $0x10] sm:$0xf]
    %v115 = vld [vmem:[%s1 + $0x14] sm:$0xf]
    %v116 = vld [vmem:[%s1 + $0x18] sm:$0xf]
    %v117 = vld [vmem:[%s1 + $0x1c] sm:$0xf]
    %v118 = vld [vmem:[%s1 + $0x20] sm:$0xf]
    %v119 = vld [vmem:[%s1 + $0x24] sm:$0xf]
    %v120 = vld [vmem:[%s1 + $0x28] sm:$0xf]
    %v121 = vld [vmem:[%s1 + $0x2c] sm:$0xf]
    %v122 = vld [vmem:[%s1 + $0x30] sm:$0xf]
    %v123 = vld [vmem:[%s1 + $0x34] sm:$0xf]
    %v124 = vld [vmem:[%s1 + $0x38] sm:$0xf]
    %v125 = vld [vmem:[%s1 + $0x3c] sm:$0xf]
    %v126 = vld [vmem:[%s1 + $0x40] sm:$0xf]
    %v127 = vld [vmem:[%s1 + $0x44] sm:$0xf]
    %v128 = vld [vmem:[%s1 + $0x48] sm:$0xf]
    %v129 = vld [vmem:[%s1 + $0x4c] sm:$0xf]
    %v130 = vld [vmem:[%s1 + $0x50] sm:$0xf]
    %v131 = vld [vmem:[%s1 + $0x54] sm:$0xf]
    %v132 = vld [vmem:[%s1 + $0x58] sm:$0xf]
    %v133 = vld [vmem:[%s1 + $0x5c] sm:$0xf]
    %v134 = vld [vmem:[%s1 + $0x60] sm:$0xf]
    %v135 = vld [vmem:[%s1 + $0x64] sm:$0xf]
    %v136 = vld [vmem:[%s1 + $0x68] sm:$0xf]
    %v137 = vld [vmem:[%s1 + $0x6c] sm:$0xf]
    %v138 = vld [vmem:[%s1 + $0x70] sm:$0xf]
    %v139 = vld [vmem:[%s1 + $0x74] sm:$0xf]
    %v140 = vld [vmem:[%s1 + $0x78] sm:$0xf]
    %v141 = vld [vmem:[%s1 + $0x7c] sm:$0xf]
    %v142 = vld [vmem:[%s2] sm:$0x1]
    %v144 = vlaneseq
    %v145 = vshrl.u32 %v144, 7
    %v146 = vsub.s32 0, %v145
    %v147 = vrot.slane %v142, %v146
    %v181 = vunpack.c.l.b16 %v110
    %v182 = vunpack.c.l.b16 %v111
    %v183 = vunpack.c.l.b16 %v112
    %v184 = vunpack.c.l.b16 %v113
    %v185 = vunpack.c.l.b16 %v114
    %v186 = vunpack.c.l.b16 %v115
    %v187 = vunpack.c.l.b16 %v116
    %v188 = vunpack.c.l.b16 %v117
    %v189 = vunpack.c.l.b16 %v118
    %v190 = vunpack.c.l.b16 %v119
    %v191 = vunpack.c.l.b16 %v120
    %v192 = vunpack.c.l.b16 %v121
    %v193 = vunpack.c.l.b16 %v122
    %v194 = vunpack.c.l.b16 %v123
    %v195 = vunpack.c.l.b16 %v124
    %v196 = vunpack.c.l.b16 %v125
    %v197 = vunpack.c.l.b16 %v126
    %v198 = vunpack.c.l.b16 %v127
    %v199 = vunpack.c.l.b16 %v128
    %v200 = vunpack.c.l.b16 %v129
    %v201 = vunpack.c.l.b16 %v130
    %v202 = vunpack.c.l.b16 %v131
    %v203 = vunpack.c.l.b16 %v132
    %v204 = vunpack.c.l.b16 %v133
    %v205 = vunpack.c.l.b16 %v134
    %v206 = vunpack.c.l.b16 %v135
    %v207 = vunpack.c.l.b16 %v136
    %v208 = vunpack.c.l.b16 %v137
    %v209 = vunpack.c.l.b16 %v138
    %v210 = vunpack.c.l.b16 %v139
    %v211 = vunpack.c.l.b16 %v140
    %v212 = vunpack.c.l.b16 %v141
    %v213 = vpack.c.b16 %v182, %v181
    %v214 = vpack.c.b16 %v184, %v183
    %v215 = vpack.c.b16 %v186, %v185
    %v216 = vpack.c.b16 %v188, %v187
    %v217 = vpack.c.b16 %v190, %v189
    %v218 = vpack.c.b16 %v192, %v191
    %v219 = vpack.c.b16 %v194, %v193
    %v220 = vpack.c.b16 %v196, %v195
    %v221 = vpack.c.b16 %v198, %v197
    %v222 = vpack.c.b16 %v200, %v199
    %v223 = vpack.c.b16 %v202, %v201
    %v224 = vpack.c.b16 %v204, %v203
    %v225 = vpack.c.b16 %v206, %v205
    %v226 = vpack.c.b16 %v208, %v207
    %v227 = vpack.c.b16 %v210, %v209
    %v228 = vpack.c.b16 %v212, %v211
    %245 = vmatprep.subr.bf16.mxu0 0
    %246 = vmatpush1.bf16.msra.mxu0 %v213
    %247 = vmatprep.subr.bf16.mxu0 0
    %248 = vmatpush1.bf16.msra.mxu0 %v214
    %249 = vmatprep.subr.bf16.mxu0 0
    %250 = vmatpush1.bf16.msra.mxu0 %v215
    %251 = vmatprep.subr.bf16.mxu0 0
    %252 = vmatpush1.bf16.msra.mxu0 %v216
    %253 = vmatprep.subr.bf16.mxu0 0
    %254 = vmatpush1.bf16.msra.mxu0 %v217
    %255 = vmatprep.subr.bf16.mxu0 0
    %256 = vmatpush1.bf16.msra.mxu0 %v218
    %257 = vmatprep.subr.bf16.mxu0 0
    %258 = vmatpush1.bf16.msra.mxu0 %v219
    %259 = vmatprep.subr.bf16.mxu0 0
    %260 = vmatpush1.bf16.msra.mxu0 %v220
    %261 = vmatprep.subr.bf16.mxu0 0
    %262 = vmatpush1.bf16.msra.mxu0 %v221
    %263 = vmatprep.subr.bf16.mxu0 0
    %264 = vmatpush1.bf16.msra.mxu0 %v222
    %265 = vmatprep.subr.bf16.mxu0 0
    %266 = vmatpush1.bf16.msra.mxu0 %v223
    %267 = vmatprep.subr.bf16.mxu0 0
    %268 = vmatpush1.bf16.msra.mxu0 %v224
    %269 = vmatprep.subr.bf16.mxu0 0
    %270 = vmatpush1.bf16.msra.mxu0 %v225
    %271 = vmatprep.subr.bf16.mxu0 0
    %272 = vmatpush1.bf16.msra.mxu0 %v226
    %273 = vmatprep.subr.bf16.mxu0 0
    %274 = vmatpush1.bf16.msra.mxu0 %v227
    %275 = vmatprep.subr.bf16.mxu0 0
    %276 = vmatpush1.bf16.msra.mxu0 %v228
    %277 = vmatprep.mubr.bf16.mxu0 %v85
    %278 = vmatmul.mubr.bf16.gmra.mrb[0].mxu0 %v84
    %v279 = vpop.f32.mrb[0].mxu0
    %v280 = vadd.f32 %v147, %v279
    %v281 = vpop.f32.mrb[0].mxu0
    %v282 = vpop.f32.mrb[0].mxu0
    %v283 = vadd.f32 %v147, %v282
    %v284 = vpop.f32.mrb[0].mxu0
    %285 = vmatprep.mubr.bf16.mxu0 %v87
    %286 = vmatmul.mubr.bf16.gmra.mrb[0].mxu0 %v86
    %v287 = vpop.f32.mrb[0].mxu0
    %v288 = vadd.f32 %v147, %v287
    %v289 = vpop.f32.mrb[0].mxu0
    %v290 = vpop.f32.mrb[0].mxu0
    %v291 = vadd.f32 %v147, %v290
    %v292 = vpop.f32.mrb[0].mxu0
    %293 = vmatprep.mubr.bf16.mxu0 %v89
    %294 = vmatmul.mubr.bf16.gmra.mrb[0].mxu0 %v88
    %v295 = vpop.f32.mrb[0].mxu0
    %v296 = vadd.f32 %v147, %v295
    %v297 = vpop.f32.mrb[0].mxu0
    %v298 = vpop.f32.mrb[0].mxu0
    %v299 = vadd.f32 %v147, %v298
    %v300 = vpop.f32.mrb[0].mxu0
    %301 = vmatprep.mubr.bf16.mxu0 %v91
    %302 = vmatmul.mubr.bf16.gmra.mrb[0].mxu0 %v90
    %v303 = vpop.f32.mrb[0].mxu0
    %v304 = vadd.f32 %v147, %v303
    %v305 = vpop.f32.mrb[0].mxu0
    %v306 = vpop.f32.mrb[0].mxu0
    %v307 = vadd.f32 %v147, %v306
    %v308 = vpop.f32.mrb[0].mxu0
    %309 = vmatprep.mubr.bf16.mxu0 %v93
    %310 = vmatmul.mubr.bf16.gmra.mrb[0].mxu0 %v92
    %v311 = vpop.f32.mrb[0].mxu0
    %v312 = vadd.f32 %v147, %v311
    %v313 = vpop.f32.mrb[0].mxu0
    %v314 = vpop.f32.mrb[0].mxu0
    %v315 = vadd.f32 %v147, %v314
    %v316 = vpop.f32.mrb[0].mxu0
    %317 = vmatprep.mubr.bf16.mxu0 %v95
    %318 = vmatmul.mubr.bf16.gmra.mrb[0].mxu0 %v94
    %v319 = vpop.f32.mrb[0].mxu0
    %v320 = vadd.f32 %v147, %v319
    %v321 = vpop.f32.mrb[0].mxu0
    %v322 = vpop.f32.mrb[0].mxu0
    %v323 = vadd.f32 %v147, %v322
    %v324 = vpop.f32.mrb[0].mxu0
    %325 = vmatprep.mubr.bf16.mxu0 %v97
    %326 = vmatmul.mubr.bf16.gmra.mrb[0].mxu0 %v96
    %v327 = vpop.f32.mrb[0].mxu0
    %v328 = vadd.f32 %v147, %v327
    %v329 = vpop.f32.mrb[0].mxu0
    %v330 = vpop.f32.mrb[0].mxu0
    %v331 = vadd.f32 %v147, %v330
    %v332 = vpop.f32.mrb[0].mxu0
    %333 = vmatprep.mubr.bf16.mxu0 %v99
    %334 = vmatmul.mubr.bf16.gmra.mrb[0].mxu0 %v98
    %v335 = vpop.f32.mrb[0].mxu0
    %v336 = vadd.f32 %v147, %v335
    %v337 = vpop.f32.mrb[0].mxu0
    %v338 = vpop.f32.mrb[0].mxu0
    %v339 = vadd.f32 %v147, %v338
    %v340 = vpop.f32.mrb[0].mxu0
    %341 = vmatprep.mubr.bf16.mxu0 %v101
    %342 = vmatmul.mubr.bf16.gmra.mrb[0].mxu0 %v100
    %v343 = vpop.f32.mrb[0].mxu0
    %v344 = vadd.f32 %v147, %v343
    %v345 = vpop.f32.mrb[0].mxu0
    %v346 = vpop.f32.mrb[0].mxu0
    %v347 = vadd.f32 %v147, %v346
    %v348 = vpop.f32.mrb[0].mxu0
    %349 = vmatprep.mubr.bf16.mxu0 %v103
    %350 = vmatmul.mubr.bf16.gmra.mrb[0].mxu0 %v102
    %v351 = vpop.f32.mrb[0].mxu0
    %v352 = vadd.f32 %v147, %v351
    %v353 = vpop.f32.mrb[0].mxu0
    %v354 = vpop.f32.mrb[0].mxu0
    %v355 = vadd.f32 %v147, %v354
    %v356 = vpop.f32.mrb[0].mxu0
    %357 = vmatprep.mubr.bf16.mxu0 %v105
    %358 = vmatmul.mubr.bf16.gmra.mrb[0].mxu0 %v104
    %v359 = vpop.f32.mrb[0].mxu0
    %v360 = vadd.f32 %v147, %v359
    %v361 = vpop.f32.mrb[0].mxu0
    %v362 = vpop.f32.mrb[0].mxu0
    %v363 = vadd.f32 %v147, %v362
    %v364 = vpop.f32.mrb[0].mxu0
    %365 = vmatprep.mubr.bf16.mxu0 %v107
    %366 = vmatmul.mubr.bf16.gmra.mrb[0].mxu0 %v106
    %v367 = vpop.f32.mrb[0].mxu0
    %v368 = vadd.f32 %v147, %v367
    %v369 = vpop.f32.mrb[0].mxu0
    %v370 = vpop.f32.mrb[0].mxu0
    %v371 = vadd.f32 %v147, %v370
    %v372 = vpop.f32.mrb[0].mxu0
    %373 = vmatprep.mubr.bf16.mxu0 %v109
    %374 = vmatmul.mubr.bf16.gmra.mrb[0].mxu0 %v108
    %v375 = vpop.f32.mrb[0].mxu0
    %v376 = vadd.f32 %v147, %v375
    %v377 = vpop.f32.mrb[0].mxu0
    %v378 = vpop.f32.mrb[0].mxu0
    %v379 = vadd.f32 %v147, %v378
    %v380 = vpop.f32.mrb[0].mxu0
    %381 = vdwg.mxu0
    %v382 = vmax.f32 %v280, 0.0
    %v383 = vmax.f32 %v283, 0.0
    %v384 = vmax.f32 %v288, 0.0
    %v385 = vmax.f32 %v291, 0.0
    %v386 = vmax.f32 %v296, 0.0
    %v387 = vmax.f32 %v299, 0.0
    %v388 = vmax.f32 %v304, 0.0
    %v389 = vmax.f32 %v307, 0.0
    %v390 = vmax.f32 %v312, 0.0
    %v391 = vmax.f32 %v315, 0.0
    %v392 = vmax.f32 %v320, 0.0
    %v393 = vmax.f32 %v323, 0.0
    %v394 = vmax.f32 %v328, 0.0
    %v395 = vmax.f32 %v331, 0.0
    %v396 = vmax.f32 %v336, 0.0
    %v397 = vmax.f32 %v339, 0.0
    %v398 = vmax.f32 %v344, 0.0
    %v399 = vmax.f32 %v347, 0.0
    %v400 = vmax.f32 %v352, 0.0
    %v401 = vmax.f32 %v355, 0.0
    %v402 = vmax.f32 %v360, 0.0
    %v403 = vmax.f32 %v363, 0.0
    %v404 = vmax.f32 %v368, 0.0
    %v405 = vmax.f32 %v371, 0.0
    %v406 = vmax.f32 %v376, 0.0
    %v407 = vmax.f32 %v379, 0.0
    %408 = vst [vmem:[#allocation3] sm:$0xff] %v382
    %409 = vst [vmem:[#allocation3 + $0x8] sm:$0xff] %v383
    %410 = vst [vmem:[#allocation3 + $0x10] sm:$0xff] %v384
    %411 = vst [vmem:[#allocation3 + $0x18] sm:$0xff] %v385
    %412 = vst [vmem:[#allocation3 + $0x20] sm:$0xff] %v386
    %413 = vst [vmem:[#allocation3 + $0x28] sm:$0xff] %v387
    %414 = vst [vmem:[#allocation3 + $0x30] sm:$0xff] %v388
    %415 = vst [vmem:[#allocation3 + $0x38] sm:$0xff] %v389
    %416 = vst [vmem:[#allocation3 + $0x40] sm:$0xff] %v390
    %417 = vst [vmem:[#allocation3 + $0x48] sm:$0xff] %v391
    %418 = vst [vmem:[#allocation3 + $0x50] sm:$0xff] %v392
    %419 = vst [vmem:[#allocation3 + $0x58] sm:$0xff] %v393
    %420 = vst [vmem:[#allocation3 + $0x60] sm:$0xff] %v394
    %421 = vst [vmem:[#allocation3 + $0x68] sm:$0xff] %v395
    %422 = vst [vmem:[#allocation3 + $0x70] sm:$0xff] %v396
    %423 = vst [vmem:[#allocation3 + $0x78] sm:$0xff] %v397
    %424 = vst [vmem:[#allocation3 + $0x80] sm:$0xff] %v398
    %425 = vst [vmem:[#allocation3 + $0x88] sm:$0xff] %v399
    %426 = vst [vmem:[#allocation3 + $0x90] sm:$0xff] %v400
    %427 = vst [vmem:[#allocation3 + $0x98] sm:$0xff] %v401
    %428 = vst [vmem:[#allocation3 + $0xa0] sm:$0xff] %v402
    %429 = vst [vmem:[#allocation3 + $0xa8] sm:$0xff] %v403
    %430 = vst [vmem:[#allocation3 + $0xb0] sm:$0xff] %v404
    %431 = vst [vmem:[#allocation3 + $0xb8] sm:$0xff] %v405
    %432 = vst [vmem:[#allocation3 + $0xc0] sm:$0xff] %v406
    %433 = vst [vmem:[#allocation3 + $0xc8] sm:$0xff] %v407
    %v434 = vpack.c.bf16 %v383, %v382
    %v435 = vpack.c.bf16 %v385, %v384
    %v436 = vpack.c.bf16 %v387, %v386
    %v437 = vpack.c.bf16 %v389, %v388
    %v438 = vpack.c.bf16 %v391, %v390
    %v439 = vpack.c.bf16 %v393, %v392
    %v440 = vpack.c.bf16 %v395, %v394
    %v441 = vpack.c.bf16 %v397, %v396
    %v442 = vpack.c.bf16 %v399, %v398
    %v443 = vpack.c.bf16 %v401, %v400
    %v444 = vpack.c.bf16 %v403, %v402
    %v445 = vpack.c.bf16 %v405, %v404
    %v446 = vpack.c.bf16 %v407, %v406
    %v447 = vld [vmem:[%s3] sm:$0xff]
    %v448 = vld [vmem:[%s3 + $0x8] sm:$0xff]
    %v449 = vld [vmem:[%s3 + $0x10] sm:$0xff]
    %v450 = vld [vmem:[%s3 + $0x18] sm:$0xff]
    %v451 = vld [vmem:[%s3 + $0x20] sm:$0xff]
    %v452 = vld [vmem:[%s3 + $0x28] sm:$0xff]
    %v453 = vld [vmem:[%s3 + $0x30] sm:$0xff]
    %v454 = vld [vmem:[%s3 + $0x38] sm:$0xff]
    %v455 = vld [vmem:[%s3 + $0x40] sm:$0xff]
    %v456 = vld [vmem:[%s3 + $0x48] sm:$0xff]
    %v457 = vld [vmem:[%s3 + $0x50] sm:$0xff]
    %v458 = vld [vmem:[%s3 + $0x58] sm:$0xff]
    %v459 = vld [vmem:[%s3 + $0x60] sm:$0xff]
    %v460 = vld [vmem:[%s3 + $0x68] sm:$0xff]
    %v461 = vld [vmem:[%s3 + $0x70] sm:$0xff]
    %v462 = vld [vmem:[%s3 + $0x78] sm:$0xff]
    %v463 = vld [vmem:[%s4] sm:$0x3]
    %v465 = vlaneseq
    %v466 = vshrl.u32 %v465, 7
    %v467 = vsub.s32 0, %v466
    %v468 = vrot.slane %v463, %v467
    %v469 = vlaneseq
    %v470 = vshrl.u32 %v469, 7
    %v471 = vsub.s32 1, %v470
    %v472 = vrot.slane %v463, %v471
    %v491 = vunpack.c.l.b16 %v447
    %v492 = vunpack.c.h.b16 %v447
    %v493 = vunpack.c.l.b16 %v448
    %v494 = vunpack.c.h.b16 %v448
    %v495 = vunpack.c.l.b16 %v449
    %v496 = vunpack.c.h.b16 %v449
    %v497 = vunpack.c.l.b16 %v450
    %v498 = vunpack.c.h.b16 %v450
    %v499 = vunpack.c.l.b16 %v451
    %v500 = vunpack.c.h.b16 %v451
    %v501 = vunpack.c.l.b16 %v452
    %v502 = vunpack.c.h.b16 %v452
    %v503 = vunpack.c.l.b16 %v453
    %v504 = vunpack.c.h.b16 %v453
    %v505 = vunpack.c.l.b16 %v454
    %v506 = vunpack.c.h.b16 %v454
    %v507 = vunpack.c.l.b16 %v455
    %v508 = vunpack.c.h.b16 %v455
    %v509 = vunpack.c.l.b16 %v456
    %v510 = vunpack.c.h.b16 %v456
    %v511 = vunpack.c.l.b16 %v457
    %v512 = vunpack.c.h.b16 %v457
    %v513 = vunpack.c.l.b16 %v458
    %v514 = vunpack.c.h.b16 %v458
    %v515 = vunpack.c.l.b16 %v459
    %v516 = vunpack.c.h.b16 %v459
    %v517 = vunpack.c.l.b16 %v460
    %v518 = vunpack.c.h.b16 %v460
    %v519 = vunpack.c.l.b16 %v461
    %v520 = vunpack.c.h.b16 %v461
    %v521 = vunpack.c.l.b16 %v462
    %v522 = vunpack.c.h.b16 %v462
    %v523 = vpack.c.b16 %v493, %v491
    %v524 = vpack.c.b16 %v494, %v492
    %v525 = vpack.c.b16 %v497, %v495
    %v526 = vpack.c.b16 %v498, %v496
    %v527 = vpack.c.b16 %v501, %v499
    %v528 = vpack.c.b16 %v502, %v500
    %v529 = vpack.c.b16 %v505, %v503
    %v530 = vpack.c.b16 %v506, %v504
    %v531 = vpack.c.b16 %v509, %v507
    %v532 = vpack.c.b16 %v510, %v508
    %v533 = vpack.c.b16 %v513, %v511
    %v534 = vpack.c.b16 %v514, %v512
    %v535 = vpack.c.b16 %v517, %v515
    %v536 = vpack.c.b16 %v518, %v516
    %v537 = vpack.c.b16 %v521, %v519
    %v538 = vpack.c.b16 %v522, %v520
    %555 = vmatprep.subr.bf16.mxu0 %v524
    %556 = vmatpush1.bf16.msra.mxu0 %v523
    %557 = vmatprep.subr.bf16.mxu0 %v526
    %558 = vmatpush1.bf16.msra.mxu0 %v525
    %559 = vmatprep.subr.bf16.mxu0 %v528
    %560 = vmatpush1.bf16.msra.mxu0 %v527
    %561 = vmatprep.subr.bf16.mxu0 %v530
    %562 = vmatpush1.bf16.msra.mxu0 %v529
    %563 = vmatprep.subr.bf16.mxu0 %v532
    %564 = vmatpush1.bf16.msra.mxu0 %v531
    %565 = vmatprep.subr.bf16.mxu0 %v534
    %566 = vmatpush1.bf16.msra.mxu0 %v533
    %567 = vmatprep.subr.bf16.mxu0 %v536
    %568 = vmatpush1.bf16.msra.mxu0 %v535
    %569 = vmatprep.subr.bf16.mxu0 %v538
    %570 = vmatpush1.bf16.msra.mxu0 %v537
    %571 = vmatprep.subr.bf16.mxu0 0
    %572 = vmatpush1.bf16.msra.mxu0 0
    %573 = vmatprep.subr.bf16.mxu0 0
    %574 = vmatpush1.bf16.msra.mxu0 0
    %575 = vmatprep.subr.bf16.mxu0 0
    %576 = vmatpush1.bf16.msra.mxu0 0
    %577 = vmatprep.subr.bf16.mxu0 0
    %578 = vmatpush1.bf16.msra.mxu0 0
    %579 = vmatprep.subr.bf16.mxu0 0
    %580 = vmatpush1.bf16.msra.mxu0 0
    %581 = vmatprep.subr.bf16.mxu0 0
    %582 = vmatpush1.bf16.msra.mxu0 0
    %583 = vmatprep.subr.bf16.mxu0 0
    %584 = vmatpush1.bf16.msra.mxu0 0
    %585 = vmatprep.subr.bf16.mxu0 0
    %586 = vmatpush1.bf16.msra.mxu0 0
    %587 = vmatprep.mubr.bf16.mxu0 0
    %588 = vmatmul.mubr.bf16.gmra.mrb[0].mxu0 %v434
    %v589 = vpop.f32.mrb[0].mxu0
    %v590 = vadd.f32 %v468, %v589
    %v591 = vpop.f32.mrb[0].mxu0
    %v592 = vadd.f32 %v472, %v591
    %v593 = vpop.f32.mrb[0].mxu0
    %v594 = vadd.f32 %v468, %v593
    %v595 = vpop.f32.mrb[0].mxu0
    %v596 = vadd.f32 %v472, %v595
    %597 = vmatprep.mubr.bf16.mxu0 0
    %598 = vmatmul.mubr.bf16.gmra.mrb[0].mxu0 %v435
    %v599 = vpop.f32.mrb[0].mxu0
    %v600 = vadd.f32 %v468, %v599
    %v601 = vpop.f32.mrb[0].mxu0
    %v602 = vadd.f32 %v472, %v601
    %v603 = vpop.f32.mrb[0].mxu0
    %v604 = vadd.f32 %v468, %v603
    %v605 = vpop.f32.mrb[0].mxu0
    %v606 = vadd.f32 %v472, %v605
    %607 = vmatprep.mubr.bf16.mxu0 0
    %608 = vmatmul.mubr.bf16.gmra.mrb[0].mxu0 %v436
    %v609 = vpop.f32.mrb[0].mxu0
    %v610 = vadd.f32 %v468, %v609
    %v611 = vpop.f32.mrb[0].mxu0
    %v612 = vadd.f32 %v472, %v611
    %v613 = vpop.f32.mrb[0].mxu0
    %v614 = vadd.f32 %v468, %v613
    %v615 = vpop.f32.mrb[0].mxu0
    %v616 = vadd.f32 %v472, %v615
    %617 = vmatprep.mubr.bf16.mxu0 0
    %618 = vmatmul.mubr.bf16.gmra.mrb[0].mxu0 %v437
    %v619 = vpop.f32.mrb[0].mxu0
    %v620 = vadd.f32 %v468, %v619
    %v621 = vpop.f32.mrb[0].mxu0
    %v622 = vadd.f32 %v472, %v621
    %v623 = vpop.f32.mrb[0].mxu0
    %v624 = vadd.f32 %v468, %v623
    %v625 = vpop.f32.mrb[0].mxu0
    %v626 = vadd.f32 %v472, %v625
    %627 = vmatprep.mubr.bf16.mxu0 0
    %628 = vmatmul.mubr.bf16.gmra.mrb[0].mxu0 %v438
    %v629 = vpop.f32.mrb[0].mxu0
    %v630 = vadd.f32 %v468, %v629
    %v631 = vpop.f32.mrb[0].mxu0
    %v632 = vadd.f32 %v472, %v631
    %v633 = vpop.f32.mrb[0].mxu0
    %v634 = vadd.f32 %v468, %v633
    %v635 = vpop.f32.mrb[0].mxu0
    %v636 = vadd.f32 %v472, %v635
    %637 = vmatprep.mubr.bf16.mxu0 0
    %638 = vmatmul.mubr.bf16.gmra.mrb[0].mxu0 %v439
    %v639 = vpop.f32.mrb[0].mxu0
    %v640 = vadd.f32 %v468, %v639
    %v641 = vpop.f32.mrb[0].mxu0
    %v642 = vadd.f32 %v472, %v641
    %v643 = vpop.f32.mrb[0].mxu0
    %v644 = vadd.f32 %v468, %v643
    %v645 = vpop.f32.mrb[0].mxu0
    %v646 = vadd.f32 %v472, %v645
    %647 = vmatprep.mubr.bf16.mxu0 0
    %648 = vmatmul.mubr.bf16.gmra.mrb[0].mxu0 %v440
    %v649 = vpop.f32.mrb[0].mxu0
    %v650 = vadd.f32 %v468, %v649
    %v651 = vpop.f32.mrb[0].mxu0
    %v652 = vadd.f32 %v472, %v651
    %v653 = vpop.f32.mrb[0].mxu0
    %v654 = vadd.f32 %v468, %v653
    %v655 = vpop.f32.mrb[0].mxu0
    %v656 = vadd.f32 %v472, %v655
    %657 = vmatprep.mubr.bf16.mxu0 0
    %658 = vmatmul.mubr.bf16.gmra.mrb[0].mxu0 %v441
    %v659 = vpop.f32.mrb[0].mxu0
    %v660 = vadd.f32 %v468, %v659
    %v661 = vpop.f32.mrb[0].mxu0
    %v662 = vadd.f32 %v472, %v661
    %v663 = vpop.f32.mrb[0].mxu0
    %v664 = vadd.f32 %v468, %v663
    %v665 = vpop.f32.mrb[0].mxu0
    %v666 = vadd.f32 %v472, %v665
    %667 = vmatprep.mubr.bf16.mxu0 0
    %668 = vmatmul.mubr.bf16.gmra.mrb[0].mxu0 %v442
    %v669 = vpop.f32.mrb[0].mxu0
    %v670 = vadd.f32 %v468, %v669
    %v671 = vpop.f32.mrb[0].mxu0
    %v672 = vadd.f32 %v472, %v671
    %v673 = vpop.f32.mrb[0].mxu0
    %v674 = vadd.f32 %v468, %v673
    %v675 = vpop.f32.mrb[0].mxu0
    %v676 = vadd.f32 %v472, %v675
    %677 = vmatprep.mubr.bf16.mxu0 0
    %678 = vmatmul.mubr.bf16.gmra.mrb[0].mxu0 %v443
    %v679 = vpop.f32.mrb[0].mxu0
    %v680 = vadd.f32 %v468, %v679
    %v681 = vpop.f32.mrb[0].mxu0
    %v682 = vadd.f32 %v472, %v681
    %v683 = vpop.f32.mrb[0].mxu0
    %v684 = vadd.f32 %v468, %v683
    %v685 = vpop.f32.mrb[0].mxu0
    %v686 = vadd.f32 %v472, %v685
    %687 = vmatprep.mubr.bf16.mxu0 0
    %688 = vmatmul.mubr.bf16.gmra.mrb[0].mxu0 %v444
    %v689 = vpop.f32.mrb[0].mxu0
    %v690 = vadd.f32 %v468, %v689
    %v691 = vpop.f32.mrb[0].mxu0
    %v692 = vadd.f32 %v472, %v691
    %v693 = vpop.f32.mrb[0].mxu0
    %v694 = vadd.f32 %v468, %v693
    %v695 = vpop.f32.mrb[0].mxu0
    %v696 = vadd.f32 %v472, %v695
    %697 = vmatprep.mubr.bf16.mxu0 0
    %698 = vmatmul.mubr.bf16.gmra.mrb[0].mxu0 %v445
    %v699 = vpop.f32.mrb[0].mxu0
    %v700 = vadd.f32 %v468, %v699
    %v701 = vpop.f32.mrb[0].mxu0
    %v702 = vadd.f32 %v472, %v701
    %v703 = vpop.f32.mrb[0].mxu0
    %v704 = vadd.f32 %v468, %v703
    %v705 = vpop.f32.mrb[0].mxu0
    %v706 = vadd.f32 %v472, %v705
    %707 = vmatprep.mubr.bf16.mxu0 0
    %708 = vmatmul.mubr.bf16.gmra.mrb[0].mxu0 %v446
    %v709 = vpop.f32.mrb[0].mxu0
    %v710 = vadd.f32 %v468, %v709
    %v711 = vpop.f32.mrb[0].mxu0
    %v712 = vadd.f32 %v472, %v711
    %v713 = vpop.f32.mrb[0].mxu0
    %v714 = vadd.f32 %v468, %v713
    %v715 = vpop.f32.mrb[0].mxu0
    %v716 = vadd.f32 %v472, %v715
    %717 = vdwg.mxu0
    %v718 = vtanh.pop %v590
    %v719 = vtanh.pop %v594
    %v720 = vtanh.pop %v600
    %v721 = vtanh.pop %v604
    %v722 = vtanh.pop %v610
    %v723 = vtanh.pop %v614
    %v724 = vtanh.pop %v620
    %v725 = vtanh.pop %v624
    %v726 = vtanh.pop %v630
    %v727 = vtanh.pop %v634
    %v728 = vtanh.pop %v640
    %v729 = vtanh.pop %v644
    %v730 = vtanh.pop %v650
    %v731 = vtanh.pop %v654
    %v732 = vtanh.pop %v660
    %v733 = vtanh.pop %v664
    %v734 = vtanh.pop %v670
    %v735 = vtanh.pop %v674
    %v736 = vtanh.pop %v680
    %v737 = vtanh.pop %v684
    %v738 = vtanh.pop %v690
    %v739 = vtanh.pop %v694
    %v740 = vtanh.pop %v700
    %v741 = vtanh.pop %v704
    %v742 = vtanh.pop %v710
    %v743 = vtanh.pop %v714
    %v744 = vxor.u32 %v592, 2147483648
    %v745 = vxor.u32 %v596, 2147483648
    %v746 = vxor.u32 %v602, 2147483648
    %v747 = vxor.u32 %v606, 2147483648
    %v748 = vxor.u32 %v612, 2147483648
    %v749 = vxor.u32 %v616, 2147483648
    %v750 = vxor.u32 %v622, 2147483648
    %v751 = vxor.u32 %v626, 2147483648
    %v752 = vxor.u32 %v632, 2147483648
    %v753 = vxor.u32 %v636, 2147483648
    %v754 = vxor.u32 %v642, 2147483648
    %v755 = vxor.u32 %v646, 2147483648
    %v756 = vxor.u32 %v652, 2147483648
    %v757 = vxor.u32 %v656, 2147483648
    %v758 = vxor.u32 %v662, 2147483648
    %v759 = vxor.u32 %v666, 2147483648
    %v760 = vxor.u32 %v672, 2147483648
    %v761 = vxor.u32 %v676, 2147483648
    %v762 = vxor.u32 %v682, 2147483648
    %v763 = vxor.u32 %v686, 2147483648
    %v764 = vxor.u32 %v692, 2147483648
    %v765 = vxor.u32 %v696, 2147483648
    %v766 = vxor.u32 %v702, 2147483648
    %v767 = vxor.u32 %v706, 2147483648
    %v768 = vxor.u32 %v712, 2147483648
    %v769 = vxor.u32 %v716, 2147483648
    %v770 = vmul.f32 %v744, 1.442695
    %v771 = vpow.pop %v770
    %v772 = vmul.f32 %v745, 1.442695
    %v773 = vpow.pop %v772
    %v774 = vmul.f32 %v746, 1.442695
    %v775 = vpow.pop %v774
    %v776 = vmul.f32 %v747, 1.442695
    %v777 = vpow.pop %v776
    %v778 = vmul.f32 %v748, 1.442695
    %v779 = vpow.pop %v778
    %v780 = vmul.f32 %v749, 1.442695
    %v781 = vpow.pop %v780
    %v782 = vmul.f32 %v750, 1.442695
    %v783 = vpow.pop %v782
    %v784 = vmul.f32 %v751, 1.442695
    %v785 = vpow.pop %v784
    %v786 = vmul.f32 %v752, 1.442695
    %v787 = vpow.pop %v786
    %v788 = vmul.f32 %v753, 1.442695
    %v789 = vpow.pop %v788
    %v790 = vmul.f32 %v754, 1.442695
    %v791 = vpow.pop %v790
    %v792 = vmul.f32 %v755, 1.442695
    %v793 = vpow.pop %v792
    %v794 = vmul.f32 %v756, 1.442695
    %v795 = vpow.pop %v794
    %v796 = vmul.f32 %v757, 1.442695
    %v797 = vpow.pop %v796
    %v798 = vmul.f32 %v758, 1.442695
    %v799 = vpow.pop %v798
    %v800 = vmul.f32 %v759, 1.442695
    %v801 = vpow.pop %v800
    %v802 = vmul.f32 %v760, 1.442695
    %v803 = vpow.pop %v802
    %v804 = vmul.f32 %v761, 1.442695
    %v805 = vpow.pop %v804
    %v806 = vmul.f32 %v762, 1.442695
    %v807 = vpow.pop %v806
    %v808 = vmul.f32 %v763, 1.442695
    %v809 = vpow.pop %v808
    %v810 = vmul.f32 %v764, 1.442695
    %v811 = vpow.pop %v810
    %v812 = vmul.f32 %v765, 1.442695
    %v813 = vpow.pop %v812
    %v814 = vmul.f32 %v766, 1.442695
    %v815 = vpow.pop %v814
    %v816 = vmul.f32 %v767, 1.442695
    %v817 = vpow.pop %v816
    %v818 = vmul.f32 %v768, 1.442695
    %v819 = vpow.pop %v818
    %v820 = vmul.f32 %v769, 1.442695
    %v821 = vpow.pop %v820
    %v822 = vadd.f32 %v771, 1.0
    %v823 = vadd.f32 %v773, 1.0
    %v824 = vadd.f32 %v775, 1.0
    %v825 = vadd.f32 %v777, 1.0
    %v826 = vadd.f32 %v779, 1.0
    %v827 = vadd.f32 %v781, 1.0
    %v828 = vadd.f32 %v783, 1.0
    %v829 = vadd.f32 %v785, 1.0
    %v830 = vadd.f32 %v787, 1.0
    %v831 = vadd.f32 %v789, 1.0
    %v832 = vadd.f32 %v791, 1.0
    %v833 = vadd.f32 %v793, 1.0
    %v834 = vadd.f32 %v795, 1.0
    %v835 = vadd.f32 %v797, 1.0
    %v836 = vadd.f32 %v799, 1.0
    %v837 = vadd.f32 %v801, 1.0
    %v838 = vadd.f32 %v803, 1.0
    %v839 = vadd.f32 %v805, 1.0
    %v840 = vadd.f32 %v807, 1.0
    %v841 = vadd.f32 %v809, 1.0
    %v842 = vadd.f32 %v811, 1.0
    %v843 = vadd.f32 %v813, 1.0
    %v844 = vadd.f32 %v815, 1.0
    %v845 = vadd.f32 %v817, 1.0
    %v846 = vadd.f32 %v819, 1.0
    %v847 = vadd.f32 %v821, 1.0
    %v848 = vrcp.pop %v822
    %v849 = vmul.f32 1.0, %v848
    %v850 = vrcp.pop %v823
    %v851 = vmul.f32 1.0, %v850
    %v852 = vrcp.pop %v824
    %v853 = vmul.f32 1.0, %v852
    %v854 = vrcp.pop %v825
    %v855 = vmul.f32 1.0, %v854
    %v856 = vrcp.pop %v826
    %v857 = vmul.f32 1.0, %v856
    %v858 = vrcp.pop %v827
    %v859 = vmul.f32 1.0, %v858
    %v860 = vrcp.pop %v828
    %v861 = vmul.f32 1.0, %v860
    %v862 = vrcp.pop %v829
    %v863 = vmul.f32 1.0, %v862
    %v864 = vrcp.pop %v830
    %v865 = vmul.f32 1.0, %v864
    %v866 = vrcp.pop %v831
    %v867 = vmul.f32 1.0, %v866
    %v868 = vrcp.pop %v832
    %v869 = vmul.f32 1.0, %v868
    %v870 = vrcp.pop %v833
    %v871 = vmul.f32 1.0, %v870
    %v872 = vrcp.pop %v834
    %v873 = vmul.f32 1.0, %v872
    %v874 = vrcp.pop %v835
    %v875 = vmul.f32 1.0, %v874
    %v876 = vrcp.pop %v836
    %v877 = vmul.f32 1.0, %v876
    %v878 = vrcp.pop %v837
    %v879 = vmul.f32 1.0, %v878
    %v880 = vrcp.pop %v838
    %v881 = vmul.f32 1.0, %v880
    %v882 = vrcp.pop %v839
    %v883 = vmul.f32 1.0, %v882
    %v884 = vrcp.pop %v840
    %v885 = vmul.f32 1.0, %v884
    %v886 = vrcp.pop %v841
    %v887 = vmul.f32 1.0, %v886
    %v888 = vrcp.pop %v842
    %v889 = vmul.f32 1.0, %v888
    %v890 = vrcp.pop %v843
    %v891 = vmul.f32 1.0, %v890
    %v892 = vrcp.pop %v844
    %v893 = vmul.f32 1.0, %v892
    %v894 = vrcp.pop %v845
    %v895 = vmul.f32 1.0, %v894
    %v896 = vrcp.pop %v846
    %v897 = vmul.f32 1.0, %v896
    %v898 = vrcp.pop %v847
    %v899 = vmul.f32 1.0, %v898
    %v900 = vmul.f32 %v718, %v849
    %v901 = vmul.f32 %v719, %v851
    %v902 = vmul.f32 %v720, %v853
    %v903 = vmul.f32 %v721, %v855
    %v904 = vmul.f32 %v722, %v857
    %v905 = vmul.f32 %v723, %v859
    %v906 = vmul.f32 %v724, %v861
    %v907 = vmul.f32 %v725, %v863
    %v908 = vmul.f32 %v726, %v865
    %v909 = vmul.f32 %v727, %v867
    %v910 = vmul.f32 %v728, %v869
    %v911 = vmul.f32 %v729, %v871
    %v912 = vmul.f32 %v730, %v873
    %v913 = vmul.f32 %v731, %v875
    %v914 = vmul.f32 %v732, %v877
    %v915 = vmul.f32 %v733, %v879
    %v916 = vmul.f32 %v734, %v881
    %v917 = vmul.f32 %v735, %v883
    %v918 = vmul.f32 %v736, %v885
    %v919 = vmul.f32 %v737, %v887
    %v920 = vmul.f32 %v738, %v889
    %v921 = vmul.f32 %v739, %v891
    %v922 = vmul.f32 %v740, %v893
    %v923 = vmul.f32 %v741, %v895
    %v924 = vmul.f32 %v742, %v897
    %v925 = vmul.f32 %v743, %v899
    %v926 = vld [vmem:[%s5] sm:$0x1]
    %v928 = vlaneseq
    %v929 = vshrl.u32 %v928, 7
    %v930 = vsub.s32 0, %v929
    %v931 = vrot.slane %v926, %v930
    %v933 = vmul.f32 %v900, %v931
    %v934 = vmul.f32 %v901, %v931
    %v935 = vmul.f32 %v902, %v931
    %v936 = vmul.f32 %v903, %v931
    %v937 = vmul.f32 %v904, %v931
    %v938 = vmul.f32 %v905, %v931
    %v939 = vmul.f32 %v906, %v931
    %v940 = vmul.f32 %v907, %v931
    %v941 = vmul.f32 %v908, %v931
    %v942 = vmul.f32 %v909, %v931
    %v943 = vmul.f32 %v910, %v931
    %v944 = vmul.f32 %v911, %v931
    %v945 = vmul.f32 %v912, %v931
    %v946 = vmul.f32 %v913, %v931
    %v947 = vmul.f32 %v914, %v931
    %v948 = vmul.f32 %v915, %v931
    %v949 = vmul.f32 %v916, %v931
    %v950 = vmul.f32 %v917, %v931
    %v951 = vmul.f32 %v918, %v931
    %v952 = vmul.f32 %v919, %v931
    %v953 = vmul.f32 %v920, %v931
    %v954 = vmul.f32 %v921, %v931
    %v955 = vmul.f32 %v922, %v931
    %v956 = vmul.f32 %v923, %v931
    %v957 = vmul.f32 %v924, %v931
    %v958 = vmul.f32 %v925, %v931
    %959 = vadd.xlane.f32.xlu0 %v933
    %v960 = vpop.xlane.xlu0 %959
    %961 = vadd.xlane.f32.xlu0 %v934
    %v962 = vpop.xlane.xlu0 %961
    %963 = vadd.xlane.f32.xlu0 %v935
    %v964 = vpop.xlane.xlu0 %963
    %965 = vadd.xlane.f32.xlu0 %v936
    %v966 = vpop.xlane.xlu0 %965
    %967 = vadd.xlane.f32.xlu0 %v937
    %v968 = vpop.xlane.xlu0 %967
    %969 = vadd.xlane.f32.xlu0 %v938
    %v970 = vpop.xlane.xlu0 %969
    %971 = vadd.xlane.f32.xlu0 %v939
    %v972 = vpop.xlane.xlu0 %971
    %973 = vadd.xlane.f32.xlu0 %v940
    %v974 = vpop.xlane.xlu0 %973
    %975 = vadd.xlane.f32.xlu0 %v941
    %v976 = vpop.xlane.xlu0 %975
    %977 = vadd.xlane.f32.xlu0 %v942
    %v978 = vpop.xlane.xlu0 %977
    %979 = vadd.xlane.f32.xlu0 %v943
    %v980 = vpop.xlane.xlu0 %979
    %981 = vadd.xlane.f32.xlu0 %v944
    %v982 = vpop.xlane.xlu0 %981
    %983 = vadd.xlane.f32.xlu0 %v945
    %v984 = vpop.xlane.xlu0 %983
    %985 = vadd.xlane.f32.xlu0 %v946
    %v986 = vpop.xlane.xlu0 %985
    %987 = vadd.xlane.f32.xlu0 %v947
    %v988 = vpop.xlane.xlu0 %987
    %989 = vadd.xlane.f32.xlu0 %v948
    %v990 = vpop.xlane.xlu0 %989
    %991 = vadd.xlane.f32.xlu0 %v949
    %v992 = vpop.xlane.xlu0 %991
    %993 = vadd.xlane.f32.xlu0 %v950
    %v994 = vpop.xlane.xlu0 %993
    %995 = vadd.xlane.f32.xlu0 %v951
    %v996 = vpop.xlane.xlu0 %995
    %997 = vadd.xlane.f32.xlu0 %v952
    %v998 = vpop.xlane.xlu0 %997
    %999 = vadd.xlane.f32.xlu0 %v953
    %v1000 = vpop.xlane.xlu0 %999
    %1001 = vadd.xlane.f32.xlu0 %v954
    %v1002 = vpop.xlane.xlu0 %1001
    %1003 = vadd.xlane.f32.xlu0 %v955
    %v1004 = vpop.xlane.xlu0 %1003
    %1005 = vadd.xlane.f32.xlu0 %v956
    %v1006 = vpop.xlane.xlu0 %1005
    %1007 = vadd.xlane.f32.xlu0 %v957
    %v1008 = vpop.xlane.xlu0 %1007
    %1009 = vadd.xlane.f32.xlu0 %v958
    %v1010 = vpop.xlane.xlu0 %1009
    %v1011 = vld [vmem:[#allocation2] sm:$0x1]
    %v1013 = vlaneseq
    %v1014 = vshrl.u32 %v1013, 7
    %v1015 = vsub.s32 0, %v1014
    %v1016 = vrot.slane %v1011, %v1015
    %v1018 = vadd.f32 %v960, %v1016
    %v1019 = vadd.f32 %v962, %v1016
    %v1020 = vadd.f32 %v964, %v1016
    %v1021 = vadd.f32 %v966, %v1016
    %v1022 = vadd.f32 %v968, %v1016
    %v1023 = vadd.f32 %v970, %v1016
    %v1024 = vadd.f32 %v972, %v1016
    %v1025 = vadd.f32 %v974, %v1016
    %v1026 = vadd.f32 %v976, %v1016
    %v1027 = vadd.f32 %v978, %v1016
    %v1028 = vadd.f32 %v980, %v1016
    %v1029 = vadd.f32 %v982, %v1016
    %v1030 = vadd.f32 %v984, %v1016
    %v1031 = vadd.f32 %v986, %v1016
    %v1032 = vadd.f32 %v988, %v1016
    %v1033 = vadd.f32 %v990, %v1016
    %v1034 = vadd.f32 %v992, %v1016
    %v1035 = vadd.f32 %v994, %v1016
    %v1036 = vadd.f32 %v996, %v1016
    %v1037 = vadd.f32 %v998, %v1016
    %v1038 = vadd.f32 %v1000, %v1016
    %v1039 = vadd.f32 %v1002, %v1016
    %v1040 = vadd.f32 %v1004, %v1016
    %v1041 = vadd.f32 %v1006, %v1016
    %v1042 = vadd.f32 %v1008, %v1016
    %v1043 = vadd.f32 %v1010, %v1016
    %vm1044 = vcmask 7168
    %1045 = vst.msk [vmem:[#allocation5] sm:$0xff] %vm1044, %v1018
    %1046 = vst.msk [vmem:[#allocation5 + $0x8] sm:$0xff] %vm1044, %v1019
    %1047 = vst.msk [vmem:[#allocation5 + $0x10] sm:$0xff] %vm1044, %v1020
    %1048 = vst.msk [vmem:[#allocation5 + $0x18] sm:$0xff] %vm1044, %v1021
    %1049 = vst.msk [vmem:[#allocation5 + $0x20] sm:$0xff] %vm1044, %v1022
    %1050 = vst.msk [vmem:[#allocation5 + $0x28] sm:$0xff] %vm1044, %v1023
    %1051 = vst.msk [vmem:[#allocation5 + $0x30] sm:$0xff] %vm1044, %v1024
    %1052 = vst.msk [vmem:[#allocation5 + $0x38] sm:$0xff] %vm1044, %v1025
    %1053 = vst.msk [vmem:[#allocation5 + $0x40] sm:$0xff] %vm1044, %v1026
    %1054 = vst.msk [vmem:[#allocation5 + $0x48] sm:$0xff] %vm1044, %v1027
    %1055 = vst.msk [vmem:[#allocation5 + $0x50] sm:$0xff] %vm1044, %v1028
    %1056 = vst.msk [vmem:[#allocation5 + $0x58] sm:$0xff] %vm1044, %v1029
    %1057 = vst.msk [vmem:[#allocation5 + $0x60] sm:$0xff] %vm1044, %v1030
    %1058 = vst.msk [vmem:[#allocation5 + $0x68] sm:$0xff] %vm1044, %v1031
    %1059 = vst.msk [vmem:[#allocation5 + $0x70] sm:$0xff] %vm1044, %v1032
    %1060 = vst.msk [vmem:[#allocation5 + $0x78] sm:$0xff] %vm1044, %v1033
    %1061 = vst.msk [vmem:[#allocation5 + $0x80] sm:$0xff] %vm1044, %v1034
    %1062 = vst.msk [vmem:[#allocation5 + $0x88] sm:$0xff] %vm1044, %v1035
    %1063 = vst.msk [vmem:[#allocation5 + $0x90] sm:$0xff] %vm1044, %v1036
    %1064 = vst.msk [vmem:[#allocation5 + $0x98] sm:$0xff] %vm1044, %v1037
    %1065 = vst.msk [vmem:[#allocation5 + $0xa0] sm:$0xff] %vm1044, %v1038
    %1066 = vst.msk [vmem:[#allocation5 + $0xa8] sm:$0xff] %vm1044, %v1039
    %1067 = vst.msk [vmem:[#allocation5 + $0xb0] sm:$0xff] %vm1044, %v1040
    %1068 = vst.msk [vmem:[#allocation5 + $0xb8] sm:$0xff] %vm1044, %v1041
    %1069 = vst.msk [vmem:[#allocation5 + $0xc0] sm:$0xff] %vm1044, %v1042
    %1070 = vst.msk [vmem:[#allocation5 + $0xc8] sm:$0xff] %vm1044, %v1043
    // Predicated region
    $region30: #{gated_attention_mil_forward.1} parent=1 // pred_check
      _
    $region31: #{gated_attention_mil_forward.1} parent=1 // pred_check_branch
      %1072 = sbr.rel (0) target = $region33
    $region32: #{gated_attention_mil_forward.1} parent=1 // pred_region
      %s1074 = ssub.s32 3328, 3200
      %1075 = vsyncadd [#allocation4], %s1074
      %s1076 = sshll.u32 [#allocation3], 4
      %s1077 = int_to_ptr.vmem [resolvable:$true] %s1076
      %1082 = dma.vmem_to_hbm [thread:$0]  %s1077, 3200, %s7, [#allocation4], 128, 128, 8
    $region33: #{gated_attention_mil_forward.1} parent=1 // pred_fallthru
      _
    // Predicated region
    $region34: #{gated_attention_mil_forward.1} parent=1 // pred_check
      _
    $region35: #{gated_attention_mil_forward.1} parent=1 // pred_check_branch
      %1084 = sbr.rel (0) target = $region37
    $region36: #{gated_attention_mil_forward.1} parent=1 // pred_region
      // Predicated region
      $region38: #{gated_attention_mil_forward.1} parent=36 // pred_check
        _
      $region39: #{gated_attention_mil_forward.1} parent=36 // pred_check_branch
        %1086 = sbr.rel (0) target = $region41
      $region40: #{gated_attention_mil_forward.1} parent=36 // pred_region
        // Predicated region
        $region42: #{gated_attention_mil_forward.1} parent=40 // pred_check
          _
        $region43: #{gated_attention_mil_forward.1} parent=40 // pred_check_branch
          %1088 = sbr.rel (0) target = $region45
        $region44: #{gated_attention_mil_forward.1} parent=40 // pred_region
          // Predicated region
          $region57: #{gated_attention_mil_forward.1} parent=44 // pred_check
            _
          $region58: #{gated_attention_mil_forward.1} parent=44 // pred_check_branch
            %1151 = sbr.rel (0) target = $region60
          $region59: #{gated_attention_mil_forward.1} parent=44 // pred_region
            loop: start=0, step=1, limit=1
            $region61: #{gated_attention_mil_forward.1} parent=59 // loop_pre_header
              _
            $region62: #{gated_attention_mil_forward.1} parent=59 // loop_header
              %s1153 = sphi 0, %s1157
              %p1154 = scmp.ge.s32.totalorder %s1153, 1
              %s1158 = sphi [#allocation5], [#allocation5]
              %s1159 = sphi %s8, %s8
            $region63: #{gated_attention_mil_forward.1} parent=59 // loop_header_branch
              %1156 = sbr.rel (%p1154) target = $region67
            $region64: #{gated_attention_mil_forward.1} parent=59 // loop_body
              %v1160 = vld [vmem:[%s1158] sm:$0xff]
              %1161 = vst [vmem:[%s1159] sm:$0xff] %v1160
              %v1162 = vld [vmem:[%s1158 + $0x8] sm:$0xff]
              %1163 = vst [vmem:[%s1159 + $0x8] sm:$0xff] %v1162
              %v1164 = vld [vmem:[%s1158 + $0x10] sm:$0xff]
              %1165 = vst [vmem:[%s1159 + $0x10] sm:$0xff] %v1164
              %v1166 = vld [vmem:[%s1158 + $0x18] sm:$0xff]
              %1167 = vst [vmem:[%s1159 + $0x18] sm:$0xff] %v1166
              %v1168 = vld [vmem:[%s1158 + $0x20] sm:$0xff]
              %1169 = vst [vmem:[%s1159 + $0x20] sm:$0xff] %v1168
              %v1170 = vld [vmem:[%s1158 + $0x28] sm:$0xff]
              %1171 = vst [vmem:[%s1159 + $0x28] sm:$0xff] %v1170
              %v1172 = vld [vmem:[%s1158 + $0x30] sm:$0xff]
              %1173 = vst [vmem:[%s1159 + $0x30] sm:$0xff] %v1172
              %v1174 = vld [vmem:[%s1158 + $0x38] sm:$0xff]
              %1175 = vst [vmem:[%s1159 + $0x38] sm:$0xff] %v1174
              %v1176 = vld [vmem:[%s1158 + $0x40] sm:$0xff]
              %1177 = vst [vmem:[%s1159 + $0x40] sm:$0xff] %v1176
              %v1178 = vld [vmem:[%s1158 + $0x48] sm:$0xff]
              %1179 = vst [vmem:[%s1159 + $0x48] sm:$0xff] %v1178
              %v1180 = vld [vmem:[%s1158 + $0x50] sm:$0xff]
              %1181 = vst [vmem:[%s1159 + $0x50] sm:$0xff] %v1180
              %v1182 = vld [vmem:[%s1158 + $0x58] sm:$0xff]
              %1183 = vst [vmem:[%s1159 + $0x58] sm:$0xff] %v1182
              %v1184 = vld [vmem:[%s1158 + $0x60] sm:$0xff]
              %1185 = vst [vmem:[%s1159 + $0x60] sm:$0xff] %v1184
              %v1186 = vld [vmem:[%s1158 + $0x68] sm:$0xff]
              %1187 = vst [vmem:[%s1159 + $0x68] sm:$0xff] %v1186
              %v1188 = vld [vmem:[%s1158 + $0x70] sm:$0xff]
              %1189 = vst [vmem:[%s1159 + $0x70] sm:$0xff] %v1188
              %v1190 = vld [vmem:[%s1158 + $0x78] sm:$0xff]
              %1191 = vst [vmem:[%s1159 + $0x78] sm:$0xff] %v1190
              %v1192 = vld [vmem:[%s1158 + $0x80] sm:$0xff]
              %1193 = vst [vmem:[%s1159 + $0x80] sm:$0xff] %v1192
              %v1194 = vld [vmem:[%s1158 + $0x88] sm:$0xff]
              %1195 = vst [vmem:[%s1159 + $0x88] sm:$0xff] %v1194
              %v1196 = vld [vmem:[%s1158 + $0x90] sm:$0xff]
              %1197 = vst [vmem:[%s1159 + $0x90] sm:$0xff] %v1196
              %v1198 = vld [vmem:[%s1158 + $0x98] sm:$0xff]
              %1199 = vst [vmem:[%s1159 + $0x98] sm:$0xff] %v1198
              %v1200 = vld [vmem:[%s1158 + $0xa0] sm:$0xff]
              %1201 = vst [vmem:[%s1159 + $0xa0] sm:$0xff] %v1200
              %v1202 = vld [vmem:[%s1158 + $0xa8] sm:$0xff]
              %1203 = vst [vmem:[%s1159 + $0xa8] sm:$0xff] %v1202
              %v1204 = vld [vmem:[%s1158 + $0xb0] sm:$0xff]
              %1205 = vst [vmem:[%s1159 + $0xb0] sm:$0xff] %v1204
              %v1206 = vld [vmem:[%s1158 + $0xb8] sm:$0xff]
              %1207 = vst [vmem:[%s1159 + $0xb8] sm:$0xff] %v1206
              %v1208 = vld [vmem:[%s1158 + $0xc0] sm:$0xff]
              %1209 = vst [vmem:[%s1159 + $0xc0] sm:$0xff] %v1208
            $region65: #{gated_attention_mil_forward.1} parent=59 // loop_footer
              %s1157 = sadd.s32 1, %s1153
            $region66: #{gated_attention_mil_forward.1} parent=59 // loop_footer_branch
              %1152 = sbr.rel target = $region62
            $region67: #{gated_attention_mil_forward.1} parent=59 // loop_exit
              _
          $region60: #{gated_attention_mil_forward.1} parent=44 // pred_fallthru
            _
          // Predicated region
          $region68: #{gated_attention_mil_forward.1} parent=44 // pred_check
            _
          $region69: #{gated_attention_mil_forward.1} parent=44 // pred_check_branch
            %1211 = sbr.rel target = $region71
          $region70: #{gated_attention_mil_forward.1} parent=44 // pred_region
            _
          $region71: #{gated_attention_mil_forward.1} parent=44 // pred_fallthru
            _
        $region45: #{gated_attention_mil_forward.1} parent=40 // pred_fallthru
          _
        // Predicated region
        $region46: #{gated_attention_mil_forward.1} parent=40 // pred_check
          _
        $region47: #{gated_attention_mil_forward.1} parent=40 // pred_check_branch
          %1090 = sbr.rel target = $region49
        $region48: #{gated_attention_mil_forward.1} parent=40 // pred_region
          loop: start=0, step=1, limit=1
          $region50: #{gated_attention_mil_forward.1} parent=48 // loop_pre_header
            _
          $region51: #{gated_attention_mil_forward.1} parent=48 // loop_header
            %s1093 = sphi 0, %s1097
            %p1094 = scmp.ge.s32.totalorder %s1093, 1
            %s1098 = sphi [#allocation5], [#allocation5]
            %s1099 = sphi %s8, %s8
          $region52: #{gated_attention_mil_forward.1} parent=48 // loop_header_branch
            %1096 = sbr.rel (%p1094) target = $region56
          $region53: #{gated_attention_mil_forward.1} parent=48 // loop_body
            %v1100 = vld [vmem:[%s1098] sm:$0xff]
            %1101 = vst [vmem:[%s1099] sm:$0xff] %v1100
            %v1102 = vld [vmem:[%s1098 + $0x8] sm:$0xff]
            %1103 = vst [vmem:[%s1099 + $0x8] sm:$0xff] %v1102
            %v1104 = vld [vmem:[%s1098 + $0x10] sm:$0xff]
            %1105 = vst [vmem:[%s1099 + $0x10] sm:$0xff] %v1104
            %v1106 = vld [vmem:[%s1098 + $0x18] sm:$0xff]
            %1107 = vst [vmem:[%s1099 + $0x18] sm:$0xff] %v1106
            %v1108 = vld [vmem:[%s1098 + $0x20] sm:$0xff]
            %1109 = vst [vmem:[%s1099 + $0x20] sm:$0xff] %v1108
            %v1110 = vld [vmem:[%s1098 + $0x28] sm:$0xff]
            %1111 = vst [vmem:[%s1099 + $0x28] sm:$0xff] %v1110
            %v1112 = vld [vmem:[%s1098 + $0x30] sm:$0xff]
            %1113 = vst [vmem:[%s1099 + $0x30] sm:$0xff] %v1112
            %v1114 = vld [vmem:[%s1098 + $0x38] sm:$0xff]
            %1115 = vst [vmem:[%s1099 + $0x38] sm:$0xff] %v1114
            %v1116 = vld [vmem:[%s1098 + $0x40] sm:$0xff]
            %1117 = vst [vmem:[%s1099 + $0x40] sm:$0xff] %v1116
            %v1118 = vld [vmem:[%s1098 + $0x48] sm:$0xff]
            %1119 = vst [vmem:[%s1099 + $0x48] sm:$0xff] %v1118
            %v1120 = vld [vmem:[%s1098 + $0x50] sm:$0xff]
            %1121 = vst [vmem:[%s1099 + $0x50] sm:$0xff] %v1120
            %v1122 = vld [vmem:[%s1098 + $0x58] sm:$0xff]
            %1123 = vst [vmem:[%s1099 + $0x58] sm:$0xff] %v1122
            %v1124 = vld [vmem:[%s1098 + $0x60] sm:$0xff]
            %1125 = vst [vmem:[%s1099 + $0x60] sm:$0xff] %v1124
            %v1126 = vld [vmem:[%s1098 + $0x68] sm:$0xff]
            %1127 = vst [vmem:[%s1099 + $0x68] sm:$0xff] %v1126
            %v1128 = vld [vmem:[%s1098 + $0x70] sm:$0xff]
            %1129 = vst [vmem:[%s1099 + $0x70] sm:$0xff] %v1128
            %v1130 = vld [vmem:[%s1098 + $0x78] sm:$0xff]
            %1131 = vst [vmem:[%s1099 + $0x78] sm:$0xff] %v1130
            %v1132 = vld [vmem:[%s1098 + $0x80] sm:$0xff]
            %1133 = vst [vmem:[%s1099 + $0x80] sm:$0xff] %v1132
            %v1134 = vld [vmem:[%s1098 + $0x88] sm:$0xff]
            %1135 = vst [vmem:[%s1099 + $0x88] sm:$0xff] %v1134
            %v1136 = vld [vmem:[%s1098 + $0x90] sm:$0xff]
            %1137 = vst [vmem:[%s1099 + $0x90] sm:$0xff] %v1136
            %v1138 = vld [vmem:[%s1098 + $0x98] sm:$0xff]
            %1139 = vst [vmem:[%s1099 + $0x98] sm:$0xff] %v1138
            %v1140 = vld [vmem:[%s1098 + $0xa0] sm:$0xff]
            %1141 = vst [vmem:[%s1099 + $0xa0] sm:$0xff] %v1140
            %v1142 = vld [vmem:[%s1098 + $0xa8] sm:$0xff]
            %1143 = vst [vmem:[%s1099 + $0xa8] sm:$0xff] %v1142
            %v1144 = vld [vmem:[%s1098 + $0xb0] sm:$0xff]
            %1145 = vst [vmem:[%s1099 + $0xb0] sm:$0xff] %v1144
            %v1146 = vld [vmem:[%s1098 + $0xb8] sm:$0xff]
            %1147 = vst [vmem:[%s1099 + $0xb8] sm:$0xff] %v1146
            %v1148 = vld [vmem:[%s1098 + $0xc0] sm:$0xff]
            %1149 = vst [vmem:[%s1099 + $0xc0] sm:$0xff] %v1148
          $region54: #{gated_attention_mil_forward.1} parent=48 // loop_footer
            %s1097 = sadd.s32 1, %s1093
          $region55: #{gated_attention_mil_forward.1} parent=48 // loop_footer_branch
            %1092 = sbr.rel target = $region51
          $region56: #{gated_attention_mil_forward.1} parent=48 // loop_exit
            _
        $region49: #{gated_attention_mil_forward.1} parent=40 // pred_fallthru
          _
      $region41: #{gated_attention_mil_forward.1} parent=36 // pred_fallthru
        _
      %1212 = vnop
    $region37: #{gated_attention_mil_forward.1} parent=1 // pred_fallthru
      _
    // Predicated region
    $region72: #{gated_attention_mil_forward.1} parent=1 // pred_check
      _
    $region73: #{gated_attention_mil_forward.1} parent=1 // pred_check_branch
      %1214 = sbr.rel (0) target = $region75
    $region74: #{gated_attention_mil_forward.1} parent=1 // pred_region
      %1215 = dma.done [#allocation4], 3328
    $region75: #{gated_attention_mil_forward.1} parent=1 // pred_fallthru
      _
    // Predicated region
    $region76: #{gated_attention_mil_forward.1} parent=1 // pred_check
      _
    $region77: #{gated_attention_mil_forward.1} parent=1 // pred_check_branch
      %1217 = sbr.rel (0) target = $region79
    $region78: #{gated_attention_mil_forward.1} parent=1 // pred_region
      _
    $region79: #{gated_attention_mil_forward.1} parent=1 // pred_fallthru
      _
    %1218 = vsyncpa [#allocation4], 1

</llo_original>
